<compile_context>
chip_gen: v7x
topology: tpu7x:2x2x1
jax: 0.10.0
libtpu: 0.0.40
codegen_flags: <defaults>
</compile_context>

<pallas_src>
import jax
import jax.numpy as jnp
from jax.experimental import pallas as pl
from jax.experimental.pallas import tpu as pltpu


# ----------------------------- kernel ---------------------------------------

def _multimodal_kernel(add_ref, img_ref, wf_ref,
                       w1_ref, b1_ref, w2_ref, b2_ref,
                       w3a_ref, bc_ref, w4_ref, b4_ref,
                       out_ref, acc_ref):
    """Grid: (nk,) over the flattened-image contraction axis K (reduction)."""
    k = pl.program_id(0)

    @pl.when(k == 0)
    def _init():
        # fc_additional: Linear(A,64) -> ReLU -> Linear(64,64).  Tiny; run once
        # and fold its contribution (+ combined bias + folded image bias)
        # straight into the accumulator init.
        h1 = jnp.maximum(
            jnp.dot(add_ref[...], w1_ref[...],
                    preferred_element_type=jnp.float32) + b1_ref[...], 0.0)
        h2 = jnp.dot(h1, w2_ref[...],
                     preferred_element_type=jnp.float32) + b2_ref[...]
        acc_ref[...] = (jnp.dot(h2, w3a_ref[...],
                                preferred_element_type=jnp.float32)
                        + bc_ref[...])

    # Hot path: streamed (img tile) @ (folded weight tile), f32 accumulation.
    x = img_ref[...]
    w = wf_ref[...]
    if w.dtype != jnp.float32:          # bf16 weight storage option
        x = x.astype(w.dtype)           # safe for bf16; int8/fp8 would need scaling
    acc_ref[...] += jnp.dot(x, w, preferred_element_type=jnp.float32)

    @pl.when(k == pl.num_programs(0) - 1)
    def _finalize():
        comb = jnp.maximum(acc_ref[...], 0.0)               # fc_combined ReLU
        out_ref[...] = (jnp.dot(comb, w4_ref[...],
                                preferred_element_type=jnp.float32)
                        + b4_ref[...]).astype(out_ref.dtype)


# ----------------------------- helpers --------------------------------------

def _round_up(x, m):
    return ((x + m - 1) // m) * m


def _cdiv(a, b):
    return -(-a // b)


def _pad2(x, rows, cols):
    return jnp.pad(x, ((0, rows - x.shape[0]), (0, cols - x.shape[1])))


def _tpu_kind():
    try:
        return jax.devices()[0].device_kind.lower()
    except Exception:
        return ""


def _default_tiling(weight_itemsize):
    """Per-generation (block_k, vmem_budget_bytes) defaults."""
    kind = _tpu_kind()
    if "v7" in kind:                       # 64 MiB physical VMEM per TC
        return (16384 if weight_itemsize >= 4 else 32768), (48 << 20)
    if ("v2" in kind) or ("v3" in kind):   # small-VMEM legacy parts
        return 8192, (12 << 20)
    # v4 / v5e / v6e: 128 MiB VMEM
    return (32768 if weight_itemsize >= 4 else 65536), (96 << 20)


# ----------------------------- factory (fold once) --------------------------

def make_multimodal_forward(params, *, block_k=None,
                            big_weight_dtype=jnp.bfloat16,
                            vmem_budget_bytes=None):
    """Fold + pad the weights ONCE (model-load time) and return a jitted
    forward(image, additional).

    big_weight_dtype: storage dtype of the dominant streamed weight W_fold
    (accumulation is always f32 in-kernel).  bf16 is the production default
    since the kernel is HBM-bandwidth-bound; pass jnp.float32 for bit-tight
    validation against the reference.
    """
    (w_img, b_img, w1, b1, w2, b2, w3_img, w3_add, b3, w4, b4) = params

    K = w_img.shape[0]                     # flattened-image contraction dim
    A = w1.shape[0]                        # additional_input_dim
    n_hid = w1.shape[1]                    # 64
    n_comb = w3_img.shape[1]               # 128
    out_dim = w4.shape[1]

    w_dtype = jnp.dtype(big_weight_dtype) if big_weight_dtype is not None \
        else jnp.dtype(jnp.float32)
    dflt_block_k, dflt_budget = _default_tiling(w_dtype.itemsize)
    if block_k is None:
        block_k = dflt_block_k
    if vmem_budget_bytes is None:
        vmem_budget_bytes = dflt_budget

    # ---- exact fold of the synthetic image Linear into fc_combined[0] ------
    # Done here, once per model, NOT per call: the fold streams w_img (K x
    # 1000) which is ~8x the kernel's own HBM traffic.
    hp = jax.lax.Precision.HIGHEST
    w_fold = jnp.dot(w_img, w3_img, precision=hp).astype(w_dtype)     # (K, 128)
    b_comb = (jnp.dot(b_img, w3_img, precision=hp) + b3).astype(jnp.float32)

    # ---- balanced K tiling (no zero-padded tail tiles) ----------------------
    max_batch_pad = 8                                    # sublane-dense batch
    per_tk_bytes = 2 * (max_batch_pad * 4 + n_comb * w_dtype.itemsize)  # 2 bufs
    tk_cap = max(512, (((vmem_budget_bytes // 2) // per_tk_bytes) // 512) * 512)
    nk = max(1, _cdiv(K, block_k), _cdiv(K, tk_cap))
    tk = _round_up(_cdiv(K, nk), 512)                    # lane/sublane friendly
    k_pad = tk * nk

    n_out = _round_up(out_dim, 128)                      # lane-dense output

    # Pad weights once (zero padding is exact).
    wf_p = _pad2(w_fold, k_pad, n_comb)
    w4_p = _pad2(w4.astype(jnp.float32), n_comb, n_out)
    b4_p = _pad2(b4.astype(jnp.float32), 1, n_out)
    small = (w1.astype(jnp.float32), b1.astype(jnp.float32),
             w2.astype(jnp.float32), b2.astype(jnp.float32),
             w3_add.astype(jnp.float32), b_comb, w4_p, b4_p)

    @jax.jit
    def forward(image, additional):
        B = image.shape[0]
        b_pad = max(8, _round_up(B, 8))
        img_flat = image.reshape(B, -1).astype(jnp.float32)   # NCHW row-major
        assert img_flat.shape[1] == K, "image flatten dim mismatch with image_model"
        img_p = _pad2(img_flat, b_pad, k_pad)
        add_p = _pad2(additional.astype(jnp.float32), b_pad, A)

        operands = (add_p, img_p, wf_p) + small
        flops = int(2 * b_pad * (k_pad * n_comb + A * n_hid + n_hid * n_hid
                                 + n_hid * n_comb + n_comb * n_out))
        bytes_accessed = int(sum(int(x.size) * x.dtype.itemsize for x in operands)
                             + b_pad * n_out * 4)

        # Scoped VMEM: double-buffered streamed tiles + residents + margin,
        # clamped to the per-generation budget.
        streamed = 2 * (b_pad * tk * 4 + tk * n_comb * w_dtype.itemsize)
        vmem_limit = int(min(max(streamed + (4 << 20), 8 << 20),
                             vmem_budget_bytes))

        grid_spec = pltpu.PrefetchScalarGridSpec(
            num_scalar_prefetch=0,
            grid=(nk,),
            in_specs=[
                pl.BlockSpec((b_pad, A), lambda k: (0, 0)),       # additional
                pl.BlockSpec((b_pad, tk), lambda k: (0, k)),      # img (streamed)
                pl.BlockSpec((tk, n_comb), lambda k: (k, 0)),     # W_fold (streamed)
                pl.BlockSpec((A, n_hid), lambda k: (0, 0)),       # w1
                pl.BlockSpec((1, n_hid), lambda k: (0, 0)),       # b1
                pl.BlockSpec((n_hid, n_hid), lambda k: (0, 0)),   # w2
                pl.BlockSpec((1, n_hid), lambda k: (0, 0)),       # b2
                pl.BlockSpec((n_hid, n_comb), lambda k: (0, 0)),  # w3_add
                pl.BlockSpec((1, n_comb), lambda k: (0, 0)),      # b3 + folded img bias
                pl.BlockSpec((n_comb, n_out), lambda k: (0, 0)),  # w4 (padded cols)
                pl.BlockSpec((1, n_out), lambda k: (0, 0)),       # b4 (padded cols)
            ],
            out_specs=pl.BlockSpec((b_pad, n_out), lambda k: (0, 0)),
            scratch_shapes=[pltpu.VMEM((b_pad, n_comb), jnp.float32)],  # f32 acc
        )

        out_p = pl.pallas_call(
            _multimodal_kernel,
            out_shape=jax.ShapeDtypeStruct((b_pad, n_out), jnp.float32),
            grid_spec=grid_spec,
            compiler_params=pltpu.CompilerParams(
                dimension_semantics=("arbitrary",),        # K is a reduction
                vmem_limit_bytes=vmem_limit,
            ),
            cost_estimate=pl.CostEstimate(
                flops=flops, transcendentals=0, bytes_accessed=bytes_accessed),
        )(*operands)

        return out_p[:B, :out_dim]

    return forward


# ----------------------------- reference & params ----------------------------

def make_params(key, img_flat_dim, additional_dim, output_dim):
    ks = jax.random.split(key, 5)

    def lin(k, fan_in, fan_out):
        # deterministic synthetic init, roughly torch.nn.Linear scale
        bound = 1.0 / jnp.sqrt(fan_in)
        kw, kb = jax.random.split(k)
        w = jax.random.uniform(kw, (fan_in, fan_out), jnp.float32, -bound, bound)
        b = jax.random.uniform(kb, (1, fan_out), jnp.float32, -bound, bound)
        return w, b

    w_img, b_img = lin(ks[0], img_flat_dim, 1000)        # synthetic image_model
    w1, b1 = lin(ks[1], additional_dim, 64)              # fc_additional[0]
    w2, b2 = lin(ks[2], 64, 64)                          # fc_additional[2]
    w3, b3 = lin(ks[3], 1000 + 64, 128)                  # fc_combined[0]
    w4, b4 = lin(ks[4], 128, output_dim)                 # fc_combined[2]
    w3_img, w3_add = w3[:1000, :], w3[1000:, :]
    return (w_img, b_img, w1, b1, w2, b2, w3_img, w3_add, b3, w4, b4)


def reference_forward(image, additional, params):
    """Unfolded, full-precision reference matching the original module."""
    (w_img, b_img, w1, b1, w2, b2, w3_img, w3_add, b3, w4, b4) = params
    hp = jax.lax.Precision.HIGHEST
    B = image.shape[0]
    img_flat = image.reshape(B, -1)
    img_feats = jnp.dot(img_flat, w_img, precision=hp) + b_img
    h1 = jnp.maximum(jnp.dot(additional, w1, precision=hp) + b1, 0.0)
    h2 = jnp.dot(h1, w2, precision=hp) + b2
    comb = (jnp.dot(img_feats, w3_img, precision=hp)
            + jnp.dot(h2, w3_add, precision=hp) + b3)
    comb = jnp.maximum(comb, 0.0)
    return jnp.dot(comb, w4, precision=hp) + b4


# ----------------------------- demo ------------------------------------------

if __name__ == "__main__":
    key = jax.random.PRNGKey(0)
    k_img, k_add, k_par = jax.random.split(key, 3)

    B, C, H, W = 2, 4, 16, 16          # image: NCHW -> K = 1024
    A = 8                              # additional_input_dim
    OUT = 5                            # output_dim

    image = jax.random.normal(k_img, (B, C, H, W), jnp.float32)
    additional = jax.random.normal(k_add, (B, A), jnp.float32)
    params = make_params(k_par, C * H * W, A, OUT)

    ref = reference_forward(image, additional, params)

    # (a) f32 weight storage, block_k=512 -> 2 grid steps at this toy size:
    #     exercises the streamed / accumulated reduction path; tight check.
    fwd_f32 = make_multimodal_forward(params, block_k=512,
                                      big_weight_dtype=jnp.float32)
    out_f32 = jax.block_until_ready(fwd_f32(image, additional))
    assert out_f32.shape == (B, OUT)
    diff_f32 = float(jnp.max(jnp.abs(out_f32 - ref)))
    assert jnp.allclose(out_f32, ref, atol=5e-4, rtol=5e-4), f"f32 max diff {diff_f32}"

    # (b) production defaults: bf16 streamed weight, device-sized block_k
    #     (single grid step at this toy K); looser tolerance for bf16 storage.
    fwd_prod = make_multimodal_forward(params)
    out_prod = jax.block_until_ready(fwd_prod(image, additional))
    assert out_prod.shape == (B, OUT)
    diff_bf16 = float(jnp.max(jnp.abs(out_prod - ref)))
    assert jnp.allclose(out_prod, ref, atol=5e-2, rtol=5e-2), f"bf16 max diff {diff_bf16}"

    print("KERNEL_OK")
</pallas_src>

<mosaic_0001>
module attributes {stable_mosaic.version = 11 : i64} {
  func.func @_multimodal_kernel(%arg0: i32, %arg1: memref<8x8xf32, #tpu.memory_space<vmem>>, %arg2: memref<8x512xf32, #tpu.memory_space<vmem>>, %arg3: memref<512x128xf32, #tpu.memory_space<vmem>>, %arg4: memref<8x64xf32, #tpu.memory_space<vmem>>, %arg5: memref<1x64xf32, #tpu.memory_space<vmem>>, %arg6: memref<64x64xf32, #tpu.memory_space<vmem>>, %arg7: memref<1x64xf32, #tpu.memory_space<vmem>>, %arg8: memref<64x128xf32, #tpu.memory_space<vmem>>, %arg9: memref<1x128xf32, #tpu.memory_space<vmem>>, %arg10: memref<128x128xf32, #tpu.memory_space<vmem>>, %arg11: memref<1x128xf32, #tpu.memory_space<vmem>>, %arg12: memref<8x128xf32, #tpu.memory_space<vmem>>, %arg13: memref<8x128xf32, #tpu.memory_space<vmem>>) attributes {dimension_semantics = [#tpu.dimension_semantics<arbitrary>], iteration_bounds = array<i64: 2>, scalar_prefetch = 0 : i64, scratch_operands = 1 : i64, tpu.core_type = #tpu.core_type<tc>, window_params = [{pipeline_mode = #tpu.pipeline_mode<synchronous>, transform_indices = @transform_0, window_bounds = array<i64: 8, 8>}, {transform_indices = @transform_1, window_bounds = array<i64: 8, 512>}, {transform_indices = @transform_2, window_bounds = array<i64: 512, 128>}, {pipeline_mode = #tpu.pipeline_mode<synchronous>, transform_indices = @transform_3, window_bounds = array<i64: 8, 64>}, {pipeline_mode = #tpu.pipeline_mode<synchronous>, transform_indices = @transform_4, window_bounds = array<i64: 1, 64>}, {pipeline_mode = #tpu.pipeline_mode<synchronous>, transform_indices = @transform_5, window_bounds = array<i64: 64, 64>}, {pipeline_mode = #tpu.pipeline_mode<synchronous>, transform_indices = @transform_6, window_bounds = array<i64: 1, 64>}, {pipeline_mode = #tpu.pipeline_mode<synchronous>, transform_indices = @transform_7, window_bounds = array<i64: 64, 128>}, {pipeline_mode = #tpu.pipeline_mode<synchronous>, transform_indices = @transform_8, window_bounds = array<i64: 1, 128>}, {pipeline_mode = #tpu.pipeline_mode<synchronous>, transform_indices = @transform_9, window_bounds = array<i64: 128, 128>}, {pipeline_mode = #tpu.pipeline_mode<synchronous>, transform_indices = @transform_10, window_bounds = array<i64: 1, 128>}, {pipeline_mode = #tpu.pipeline_mode<synchronous>, transform_indices = @transform_11, window_bounds = array<i64: 8, 128>}]} {
    %c0_i32 = arith.constant 0 : i32
    %0 = arith.cmpi eq, %arg0, %c0_i32 : i32
    %1 = arith.extui %0 : i1 to i32
    %c0_i32_0 = arith.constant 0 : i32
    %2 = arith.cmpi ne, %1, %c0_i32_0 : i32
    scf.if %2 {
      %c0_9 = arith.constant 0 : index
      %c0_10 = arith.constant 0 : index
      %12 = vector.load %arg1[%c0_9, %c0_10] : memref<8x8xf32, #tpu.memory_space<vmem>>, vector<8x8xf32>
      %c0_11 = arith.constant 0 : index
      %c0_12 = arith.constant 0 : index
      %13 = vector.load %arg4[%c0_11, %c0_12] : memref<8x64xf32, #tpu.memory_space<vmem>>, vector<8x64xf32>
      %cst_13 = arith.constant dense<0.000000e+00> : vector<8x64xf32>
      %14 = tpu.matmul %12, %13, %cst_13 {dimension_numbers = #tpu.dot_dimension_numbers<[1], [0], [0], [1], [0, 0, 1, 1], [], []>} : vector<8x8xf32>, vector<8x64xf32>, vector<8x64xf32> -> vector<8x64xf32>
      %c0_14 = arith.constant 0 : index
      %c0_15 = arith.constant 0 : index
      %15 = vector.load %arg5[%c0_14, %c0_15] : memref<1x64xf32, #tpu.memory_space<vmem>>, vector<1x64xf32>
      %16 = vector.broadcast %15 : vector<1x64xf32> to vector<8x64xf32>
      %17 = arith.addf %14, %16 : vector<8x64xf32>
      %cst_16 = arith.constant 0.000000e+00 : f32
      %18 = vector.broadcast %cst_16 : f32 to vector<8x64xf32>
      %19 = arith.maximumf %17, %18 : vector<8x64xf32>
      %c0_17 = arith.constant 0 : index
      %c0_18 = arith.constant 0 : index
      %20 = vector.load %arg6[%c0_17, %c0_18] : memref<64x64xf32, #tpu.memory_space<vmem>>, vector<64x64xf32>
      %cst_19 = arith.constant dense<0.000000e+00> : vector<8x64xf32>
      %21 = tpu.matmul %19, %20, %cst_19 {dimension_numbers = #tpu.dot_dimension_numbers<[1], [0], [0], [1], [0, 0, 1, 1], [], []>} : vector<8x64xf32>, vector<64x64xf32>, vector<8x64xf32> -> vector<8x64xf32>
      %c0_20 = arith.constant 0 : index
      %c0_21 = arith.constant 0 : index
      %22 = vector.load %arg7[%c0_20, %c0_21] : memref<1x64xf32, #tpu.memory_space<vmem>>, vector<1x64xf32>
      %23 = vector.broadcast %22 : vector<1x64xf32> to vector<8x64xf32>
      %24 = arith.addf %21, %23 : vector<8x64xf32>
      %c0_22 = arith.constant 0 : index
      %c0_23 = arith.constant 0 : index
      %25 = vector.load %arg8[%c0_22, %c0_23] : memref<64x128xf32, #tpu.memory_space<vmem>>, vector<64x128xf32>
      %cst_24 = arith.constant dense<0.000000e+00> : vector<8x128xf32>
      %26 = tpu.matmul %24, %25, %cst_24 {dimension_numbers = #tpu.dot_dimension_numbers<[1], [0], [0], [1], [0, 0, 1, 1], [], []>} : vector<8x64xf32>, vector<64x128xf32>, vector<8x128xf32> -> vector<8x128xf32>
      %c0_25 = arith.constant 0 : index
      %c0_26 = arith.constant 0 : index
      %27 = vector.load %arg9[%c0_25, %c0_26] : memref<1x128xf32, #tpu.memory_space<vmem>>, vector<1x128xf32>
      %28 = vector.broadcast %27 : vector<1x128xf32> to vector<8x128xf32>
      %29 = arith.addf %26, %28 : vector<8x128xf32>
      %c0_27 = arith.constant 0 : index
      %c0_28 = arith.constant 0 : index
      %30 = vector.load %arg13[%c0_27, %c0_28] : memref<8x128xf32, #tpu.memory_space<vmem>>, vector<8x128xf32>
      tpu.vector_store %arg13[%c0_27, %c0_28], %29 {strides = array<i32>} : memref<8x128xf32, #tpu.memory_space<vmem>>, vector<8x128xf32>,
    } else {
    }
    %c0 = arith.constant 0 : index
    %c0_1 = arith.constant 0 : index
    %3 = vector.load %arg2[%c0, %c0_1] : memref<8x512xf32, #tpu.memory_space<vmem>>, vector<8x512xf32>
    %c0_2 = arith.constant 0 : index
    %c0_3 = arith.constant 0 : index
    %4 = vector.load %arg3[%c0_2, %c0_3] : memref<512x128xf32, #tpu.memory_space<vmem>>, vector<512x128xf32>
    %c0_4 = arith.constant 0 : index
    %c0_5 = arith.constant 0 : index
    %5 = vector.load %arg13[%c0_4, %c0_5] : memref<8x128xf32, #tpu.memory_space<vmem>>, vector<8x128xf32>
    %cst = arith.constant dense<0.000000e+00> : vector<8x128xf32>
    %6 = tpu.matmul %3, %4, %cst {dimension_numbers = #tpu.dot_dimension_numbers<[1], [0], [0], [1], [0, 0, 1, 1], [], []>} : vector<8x512xf32>, vector<512x128xf32>, vector<8x128xf32> -> vector<8x128xf32>
    %7 = arith.addf %5, %6 : vector<8x128xf32>
    %c0_6 = arith.constant 0 : index
    %c0_7 = arith.constant 0 : index
    %8 = vector.load %arg13[%c0_6, %c0_7] : memref<8x128xf32, #tpu.memory_space<vmem>>, vector<8x128xf32>
    tpu.vector_store %arg13[%c0_6, %c0_7], %7 {strides = array<i32>} : memref<8x128xf32, #tpu.memory_space<vmem>>, vector<8x128xf32>,
    %c1_i32 = arith.constant 1 : i32
    %9 = arith.cmpi eq, %arg0, %c1_i32 : i32
    %10 = arith.extui %9 : i1 to i32
    %c0_i32_8 = arith.constant 0 : i32
    %11 = arith.cmpi ne, %10, %c0_i32_8 : i32
    scf.if %11 {
      %c0_9 = arith.constant 0 : index
      %c0_10 = arith.constant 0 : index
      %12 = vector.load %arg13[%c0_9, %c0_10] : memref<8x128xf32, #tpu.memory_space<vmem>>, vector<8x128xf32>
      %cst_11 = arith.constant 0.000000e+00 : f32
      %13 = vector.broadcast %cst_11 : f32 to vector<8x128xf32>
      %14 = arith.maximumf %12, %13 : vector<8x128xf32>
      %c0_12 = arith.constant 0 : index
      %c0_13 = arith.constant 0 : index
      %15 = vector.load %arg10[%c0_12, %c0_13] : memref<128x128xf32, #tpu.memory_space<vmem>>, vector<128x128xf32>
      %cst_14 = arith.constant dense<0.000000e+00> : vector<8x128xf32>
      %16 = tpu.matmul %14, %15, %cst_14 {dimension_numbers = #tpu.dot_dimension_numbers<[1], [0], [0], [1], [0, 0, 1, 1], [], []>} : vector<8x128xf32>, vector<128x128xf32>, vector<8x128xf32> -> vector<8x128xf32>
      %c0_15 = arith.constant 0 : index
      %c0_16 = arith.constant 0 : index
      %17 = vector.load %arg11[%c0_15, %c0_16] : memref<1x128xf32, #tpu.memory_space<vmem>>, vector<1x128xf32>
      %18 = vector.broadcast %17 : vector<1x128xf32> to vector<8x128xf32>
      %19 = arith.addf %16, %18 : vector<8x128xf32>
      %c0_17 = arith.constant 0 : index
      %c0_18 = arith.constant 0 : index
      %20 = vector.load %arg12[%c0_17, %c0_18] : memref<8x128xf32, #tpu.memory_space<vmem>>, vector<8x128xf32>
      tpu.vector_store %arg12[%c0_17, %c0_18], %19 {strides = array<i32>} : memref<8x128xf32, #tpu.memory_space<vmem>>, vector<8x128xf32>,
    } else {
    }
    return
  }
  func.func @transform_0(%arg0: i32) -> (i32, i32) {
    %c0_i32 = arith.constant 0 : i32
    %c0_i32_0 = arith.constant 0 : i32
    %c0_i32_1 = arith.constant 0 : i32
    return %c0_i32, %c0_i32_0 : i32, i32
  }
  func.func @transform_1(%arg0: i32) -> (i32, i32) {
    %c0_i32 = arith.constant 0 : i32
    %c0_i32_0 = arith.constant 0 : i32
    return %c0_i32, %arg0 : i32, i32
  }
  func.func @transform_2(%arg0: i32) -> (i32, i32) {
    %c0_i32 = arith.constant 0 : i32
    %c0_i32_0 = arith.constant 0 : i32
    return %arg0, %c0_i32 : i32, i32
  }
  func.func @transform_3(%arg0: i32) -> (i32, i32) {
    %c0_i32 = arith.constant 0 : i32
    %c0_i32_0 = arith.constant 0 : i32
    %c0_i32_1 = arith.constant 0 : i32
    return %c0_i32, %c0_i32_0 : i32, i32
  }
  func.func @transform_4(%arg0: i32) -> (i32, i32) {
    %c0_i32 = arith.constant 0 : i32
    %c0_i32_0 = arith.constant 0 : i32
    %c0_i32_1 = arith.constant 0 : i32
    return %c0_i32, %c0_i32_0 : i32, i32
  }
  func.func @transform_5(%arg0: i32) -> (i32, i32) {
    %c0_i32 = arith.constant 0 : i32
    %c0_i32_0 = arith.constant 0 : i32
    %c0_i32_1 = arith.constant 0 : i32
    return %c0_i32, %c0_i32_0 : i32, i32
  }
  func.func @transform_6(%arg0: i32) -> (i32, i32) {
    %c0_i32 = arith.constant 0 : i32
    %c0_i32_0 = arith.constant 0 : i32
    %c0_i32_1 = arith.constant 0 : i32
    return %c0_i32, %c0_i32_0 : i32, i32
  }
  func.func @transform_7(%arg0: i32) -> (i32, i32) {
    %c0_i32 = arith.constant 0 : i32
    %c0_i32_0 = arith.constant 0 : i32
    %c0_i32_1 = arith.constant 0 : i32
    return %c0_i32, %c0_i32_0 : i32, i32
  }
  func.func @transform_8(%arg0: i32) -> (i32, i32) {
    %c0_i32 = arith.constant 0 : i32
    %c0_i32_0 = arith.constant 0 : i32
    %c0_i32_1 = arith.constant 0 : i32
    return %c0_i32, %c0_i32_0 : i32, i32
  }
  func.func @transform_9(%arg0: i32) -> (i32, i32) {
    %c0_i32 = arith.constant 0 : i32
    %c0_i32_0 = arith.constant 0 : i32
    %c0_i32_1 = arith.constant 0 : i32
    return %c0_i32, %c0_i32_0 : i32, i32
  }
  func.func @transform_10(%arg0: i32) -> (i32, i32) {
    %c0_i32 = arith.constant 0 : i32
    %c0_i32_0 = arith.constant 0 : i32
    %c0_i32_1 = arith.constant 0 : i32
    return %c0_i32, %c0_i32_0 : i32, i32
  }
  func.func @transform_11(%arg0: i32) -> (i32, i32) {
    %c0_i32 = arith.constant 0 : i32
    %c0_i32_0 = arith.constant 0 : i32
    %c0_i32_1 = arith.constant 0 : i32
    return %c0_i32, %c0_i32_0 : i32, i32
  }
}

</mosaic_0001>

<llo_original>
// kernel: forward.1
$region0: #{forward.1}
  #allocation0 [shape = 'u32[]', space=smem, size = 0x4, offset = 0x4, fixed_abs, tag = 'smem constant byte address 0x4 - core index']
  #allocation1 [shape = 'u32[144,128]{1,0:T(1,128)}', space=vmem, size = 0x12000, scoped, tag = 'internal scratch']
  #allocation2 [shape = 'f32[8,128]{1,0:T(8,128)}', space=vmem, size = 0x1000, scoped, tag = 'scratch operand']
  %s0 = inlined_call_operand.vmem [shape: f32[8,8], index: 0, kind: input, shape index: {}]
  %s1 = inlined_call_operand.vmem [shape: f32[8,1024], index: 1, kind: input, shape index: {}]
  %s2 = inlined_call_operand.hbm [shape: f32[1024,128], index: 2, kind: input, shape index: {}]
  %s3 = inlined_call_operand.vmem [shape: f32[8,64], index: 3, kind: input, shape index: {}]
  %s4 = inlined_call_operand.vmem [shape: f32[1,64], index: 4, kind: input, shape index: {}]
  %s5 = inlined_call_operand.vmem [shape: f32[64,64], index: 5, kind: input, shape index: {}]
  %s6 = inlined_call_operand.vmem [shape: f32[1,64], index: 6, kind: input, shape index: {}]
  %s7 = inlined_call_operand.hbm [shape: f32[64,128], index: 7, kind: input, shape index: {}]
  %s8 = inlined_call_operand.vmem [shape: f32[1,128], index: 8, kind: input, shape index: {}]
  %s9 = inlined_call_operand.vmem [shape: f32[128,128], index: 9, kind: input, shape index: {}]
  %s10 = inlined_call_operand.vmem [shape: f32[1,128], index: 10, kind: input, shape index: {}]
  %s11 = inlined_call_operand.vmem [shape: f32[8,128], index: 11, kind: output, shape index: {}]
  %s12 = sld [smem:[#allocation0]]
  $region93: #{forward.1} parent=0
    _
  %s14 = ssub.s32 1, %s12
  %s15 = scalar_select 0, %s14, %s12
  $region1: #{forward.1} parent=0
    #allocation3 [shape = 'u8[524288]{0}', space=vmem, size = 0x80000, scoped, tag = 'input window, operand 2']
    #allocation4 [shape = 's32[2]{0}', space=sflag, size = 0x8, scoped, tag = 'scoped memory for forward.1']
    #allocation5 [shape = 'u8[32768]{0}', space=vmem, size = 0x8000, scoped, tag = 'input window, operand 7, single buffered']
    #allocation6 [shape = 's32[1]{0}', space=sflag, size = 0x4, scoped, tag = 'scoped memory for forward.1']
    %16 = vsyncpa [#allocation4], 0
    %s17 = scalar_lea.sflag [#allocation4], 1
    %18 = vsyncpa %s17, 0
    %19 = vsyncpa [#allocation6], 0
    loop: start=0, step=1, limit=4
    $region2: #{forward.1} parent=1 // loop_pre_header
      _
    $region3: #{forward.1} parent=1 // loop_header
      %s21 = sphi 0, %s25
      %p22 = scmp.ge.s32.totalorder %s21, 4
      %s29 = sphi 0, %s29
      %s31 = sphi 0, %s29
      %s32 = sphi 0, %s31
      %s46 = sphi 0, %s32
      %s52 = sphi 0, %s54
      %s55 = sphi 0, %s52
      %s56 = sphi 0, %s55
      %s72 = sphi 0, %s56
      %s78 = sphi 0, %s80
      %s81 = sphi 0, %s78
      %s82 = sphi 0, %s81
      %s98 = sphi 0, %s82
      %s102 = sphi 0, %s102
      %s104 = sphi 0, %s102
      %s105 = sphi 0, %s104
      %s119 = sphi 0, %s105
      %s123 = sphi 0, %s123
      %s125 = sphi 0, %s123
      %s126 = sphi 0, %s125
      %s140 = sphi 0, %s126
      %s144 = sphi 0, %s144
      %s146 = sphi 0, %s144
      %s147 = sphi 0, %s146
      %s161 = sphi 0, %s147
      %s165 = sphi 0, %s165
      %s167 = sphi 0, %s165
      %s168 = sphi 0, %s167
      %s182 = sphi 0, %s168
      %s186 = sphi 0, %s186
      %s188 = sphi 0, %s186
      %s189 = sphi 0, %s188
      %s203 = sphi 0, %s189
      %s207 = sphi 0, %s207
      %s209 = sphi 0, %s207
      %s210 = sphi 0, %s209
      %s224 = sphi 0, %s210
      %s228 = sphi 0, %s228
      %s230 = sphi 0, %s228
      %s231 = sphi 0, %s230
      %s245 = sphi 0, %s231
      %s249 = sphi 0, %s249
      %s251 = sphi 0, %s249
      %s252 = sphi 0, %s251
      %s266 = sphi 0, %s252
      %s270 = sphi 0, %s270
      %s272 = sphi 0, %s270
      %s273 = sphi 0, %s272
      %s287 = sphi 0, %s273
    $region4: #{forward.1} parent=1 // loop_header_branch
      %24 = sbr.rel (%p22) target = $region8
    $region5: #{forward.1} parent=1 // loop_body
      %s26 = ssub.s32 %s21, 1
      %s27 = ssub.s32 %s21, 2
      %s28 = sadd.s32 %s21, 1
      %s30 = sadd.s32 %s29, 1
      %p33 = scmp.eq.s32.totalorder %s21, 1
      %p34 = scmp.ne.s32.totalorder %s29, %s31
      %p35 = scmp.eq.s32.totalorder %s21, 0
      %p36 = por %p34, %p35
      %p37 = scmp.ne.s32.totalorder %s29, %s31
      %p38 = scmp.eq.s32.totalorder %s26, 1
      %p39 = por %p37, %p38
      %p40 = scmp.ne.s32.totalorder %s31, %s32
      %p41 = scmp.eq.s32.totalorder %s26, 0
      %p42 = por %p40, %p41
      %p43 = scmp.ne.s32.totalorder %s31, %s32
      %p44 = scmp.eq.s32.totalorder %s27, 1
      %p45 = por %p43, %p44
      %p47 = scmp.ne.s32.totalorder %s32, %s46
      %p48 = scmp.eq.s32.totalorder %s27, 0
      %p49 = por %p47, %p48
      %s50 = ssub.s32 %s21, %s28
      %p51 = scmp.eq.s32.totalorder %s50, 0
      %s53 = sadd.s32 %s52, 1
      %s54 = scalar_select %p51, %s52, %s53
      %p57 = pneg %p51
      %p58 = scmp.eq.s32.totalorder %s21, 1
      %p59 = por %p57, %p58
      %p60 = scmp.ne.s32.totalorder %s52, %s55
      %p61 = scmp.eq.s32.totalorder %s21, 0
      %p62 = por %p60, %p61
      %p63 = scmp.ne.s32.totalorder %s52, %s55
      %p64 = scmp.eq.s32.totalorder %s26, 1
      %p65 = por %p63, %p64
      %p66 = scmp.ne.s32.totalorder %s55, %s56
      %p67 = scmp.eq.s32.totalorder %s26, 0
      %p68 = por %p66, %p67
      %p69 = scmp.ne.s32.totalorder %s55, %s56
      %p70 = scmp.eq.s32.totalorder %s27, 1
      %p71 = por %p69, %p70
      %p73 = scmp.ne.s32.totalorder %s56, %s72
      %p74 = scmp.eq.s32.totalorder %s27, 0
      %p75 = por %p73, %p74
      %s76 = ssub.s32 %s21, %s28
      %p77 = scmp.eq.s32.totalorder %s76, 0
      %s79 = sadd.s32 %s78, 1
      %s80 = scalar_select %p77, %s78, %s79
      %p83 = pneg %p77
      %p84 = scmp.eq.s32.totalorder %s21, 1
      %p85 = por %p83, %p84
      %p86 = scmp.ne.s32.totalorder %s78, %s81
      %p87 = scmp.eq.s32.totalorder %s21, 0
      %p88 = por %p86, %p87
      %p89 = scmp.ne.s32.totalorder %s78, %s81
      %p90 = scmp.eq.s32.totalorder %s26, 1
      %p91 = por %p89, %p90
      %p92 = scmp.ne.s32.totalorder %s81, %s82
      %p93 = scmp.eq.s32.totalorder %s26, 0
      %p94 = por %p92, %p93
      %p95 = scmp.ne.s32.totalorder %s81, %s82
      %p96 = scmp.eq.s32.totalorder %s27, 1
      %p97 = por %p95, %p96
      %p99 = scmp.ne.s32.totalorder %s82, %s98
      %p100 = scmp.eq.s32.totalorder %s27, 0
      %p101 = por %p99, %p100
      %s103 = sadd.s32 %s102, 1
      %p106 = scmp.eq.s32.totalorder %s21, 1
      %p107 = scmp.ne.s32.totalorder %s102, %s104
      %p108 = scmp.eq.s32.totalorder %s21, 0
      %p109 = por %p107, %p108
      %p110 = scmp.ne.s32.totalorder %s102, %s104
      %p111 = scmp.eq.s32.totalorder %s26, 1
      %p112 = por %p110, %p111
      %p113 = scmp.ne.s32.totalorder %s104, %s105
      %p114 = scmp.eq.s32.totalorder %s26, 0
      %p115 = por %p113, %p114
      %p116 = scmp.ne.s32.totalorder %s104, %s105
      %p117 = scmp.eq.s32.totalorder %s27, 1
      %p118 = por %p116, %p117
      %p120 = scmp.ne.s32.totalorder %s105, %s119
      %p121 = scmp.eq.s32.totalorder %s27, 0
      %p122 = por %p120, %p121
      %s124 = sadd.s32 %s123, 1
      %p127 = scmp.eq.s32.totalorder %s21, 1
      %p128 = scmp.ne.s32.totalorder %s123, %s125
      %p129 = scmp.eq.s32.totalorder %s21, 0
      %p130 = por %p128, %p129
      %p131 = scmp.ne.s32.totalorder %s123, %s125
      %p132 = scmp.eq.s32.totalorder %s26, 1
      %p133 = por %p131, %p132
      %p134 = scmp.ne.s32.totalorder %s125, %s126
      %p135 = scmp.eq.s32.totalorder %s26, 0
      %p136 = por %p134, %p135
      %p137 = scmp.ne.s32.totalorder %s125, %s126
      %p138 = scmp.eq.s32.totalorder %s27, 1
      %p139 = por %p137, %p138
      %p141 = scmp.ne.s32.totalorder %s126, %s140
      %p142 = scmp.eq.s32.totalorder %s27, 0
      %p143 = por %p141, %p142
      %s145 = sadd.s32 %s144, 1
      %p148 = scmp.eq.s32.totalorder %s21, 1
      %p149 = scmp.ne.s32.totalorder %s144, %s146
      %p150 = scmp.eq.s32.totalorder %s21, 0
      %p151 = por %p149, %p150
      %p152 = scmp.ne.s32.totalorder %s144, %s146
      %p153 = scmp.eq.s32.totalorder %s26, 1
      %p154 = por %p152, %p153
      %p155 = scmp.ne.s32.totalorder %s146, %s147
      %p156 = scmp.eq.s32.totalorder %s26, 0
      %p157 = por %p155, %p156
      %p158 = scmp.ne.s32.totalorder %s146, %s147
      %p159 = scmp.eq.s32.totalorder %s27, 1
      %p160 = por %p158, %p159
      %p162 = scmp.ne.s32.totalorder %s147, %s161
      %p163 = scmp.eq.s32.totalorder %s27, 0
      %p164 = por %p162, %p163
      %s166 = sadd.s32 %s165, 1
      %p169 = scmp.eq.s32.totalorder %s21, 1
      %p170 = scmp.ne.s32.totalorder %s165, %s167
      %p171 = scmp.eq.s32.totalorder %s21, 0
      %p172 = por %p170, %p171
      %p173 = scmp.ne.s32.totalorder %s165, %s167
      %p174 = scmp.eq.s32.totalorder %s26, 1
      %p175 = por %p173, %p174
      %p176 = scmp.ne.s32.totalorder %s167, %s168
      %p177 = scmp.eq.s32.totalorder %s26, 0
      %p178 = por %p176, %p177
      %p179 = scmp.ne.s32.totalorder %s167, %s168
      %p180 = scmp.eq.s32.totalorder %s27, 1
      %p181 = por %p179, %p180
      %p183 = scmp.ne.s32.totalorder %s168, %s182
      %p184 = scmp.eq.s32.totalorder %s27, 0
      %p185 = por %p183, %p184
      %s187 = sadd.s32 %s186, 1
      %p190 = scmp.eq.s32.totalorder %s21, 1
      %p191 = scmp.ne.s32.totalorder %s186, %s188
      %p192 = scmp.eq.s32.totalorder %s21, 0
      %p193 = por %p191, %p192
      %p194 = scmp.ne.s32.totalorder %s186, %s188
      %p195 = scmp.eq.s32.totalorder %s26, 1
      %p196 = por %p194, %p195
      %p197 = scmp.ne.s32.totalorder %s188, %s189
      %p198 = scmp.eq.s32.totalorder %s26, 0
      %p199 = por %p197, %p198
      %p200 = scmp.ne.s32.totalorder %s188, %s189
      %p201 = scmp.eq.s32.totalorder %s27, 1
      %p202 = por %p200, %p201
      %p204 = scmp.ne.s32.totalorder %s189, %s203
      %p205 = scmp.eq.s32.totalorder %s27, 0
      %p206 = por %p204, %p205
      %s208 = sadd.s32 %s207, 1
      %p211 = scmp.eq.s32.totalorder %s21, 1
      %p212 = scmp.ne.s32.totalorder %s207, %s209
      %p213 = scmp.eq.s32.totalorder %s21, 0
      %p214 = por %p212, %p213
      %p215 = scmp.ne.s32.totalorder %s207, %s209
      %p216 = scmp.eq.s32.totalorder %s26, 1
      %p217 = por %p215, %p216
      %p218 = scmp.ne.s32.totalorder %s209, %s210
      %p219 = scmp.eq.s32.totalorder %s26, 0
      %p220 = por %p218, %p219
      %p221 = scmp.ne.s32.totalorder %s209, %s210
      %p222 = scmp.eq.s32.totalorder %s27, 1
      %p223 = por %p221, %p222
      %p225 = scmp.ne.s32.totalorder %s210, %s224
      %p226 = scmp.eq.s32.totalorder %s27, 0
      %p227 = por %p225, %p226
      %s229 = sadd.s32 %s228, 1
      %p232 = scmp.eq.s32.totalorder %s21, 1
      %p233 = scmp.ne.s32.totalorder %s228, %s230
      %p234 = scmp.eq.s32.totalorder %s21, 0
      %p235 = por %p233, %p234
      %p236 = scmp.ne.s32.totalorder %s228, %s230
      %p237 = scmp.eq.s32.totalorder %s26, 1
      %p238 = por %p236, %p237
      %p239 = scmp.ne.s32.totalorder %s230, %s231
      %p240 = scmp.eq.s32.totalorder %s26, 0
      %p241 = por %p239, %p240
      %p242 = scmp.ne.s32.totalorder %s230, %s231
      %p243 = scmp.eq.s32.totalorder %s27, 1
      %p244 = por %p242, %p243
      %p246 = scmp.ne.s32.totalorder %s231, %s245
      %p247 = scmp.eq.s32.totalorder %s27, 0
      %p248 = por %p246, %p247
      %s250 = sadd.s32 %s249, 1
      %p253 = scmp.eq.s32.totalorder %s21, 1
      %p254 = scmp.ne.s32.totalorder %s249, %s251
      %p255 = scmp.eq.s32.totalorder %s21, 0
      %p256 = por %p254, %p255
      %p257 = scmp.ne.s32.totalorder %s249, %s251
      %p258 = scmp.eq.s32.totalorder %s26, 1
      %p259 = por %p257, %p258
      %p260 = scmp.ne.s32.totalorder %s251, %s252
      %p261 = scmp.eq.s32.totalorder %s26, 0
      %p262 = por %p260, %p261
      %p263 = scmp.ne.s32.totalorder %s251, %s252
      %p264 = scmp.eq.s32.totalorder %s27, 1
      %p265 = por %p263, %p264
      %p267 = scmp.ne.s32.totalorder %s252, %s266
      %p268 = scmp.eq.s32.totalorder %s27, 0
      %p269 = por %p267, %p268
      %s271 = sadd.s32 %s270, 1
      %p274 = scmp.eq.s32.totalorder %s21, 1
      %p275 = scmp.ne.s32.totalorder %s270, %s272
      %p276 = scmp.eq.s32.totalorder %s21, 0
      %p277 = por %p275, %p276
      %p278 = scmp.ne.s32.totalorder %s270, %s272
      %p279 = scmp.eq.s32.totalorder %s26, 1
      %p280 = por %p278, %p279
      %p281 = scmp.ne.s32.totalorder %s272, %s273
      %p282 = scmp.eq.s32.totalorder %s26, 0
      %p283 = por %p281, %p282
      %p284 = scmp.ne.s32.totalorder %s272, %s273
      %p285 = scmp.eq.s32.totalorder %s27, 1
      %p286 = por %p284, %p285
      %p288 = scmp.ne.s32.totalorder %s273, %s287
      %p289 = scmp.eq.s32.totalorder %s27, 0
      %p290 = por %p288, %p289
      %p291 = scmp.le.s32.totalorder 1, %s21
      %p292 = scmp.lt.s32.totalorder %s21, 3
      %p293 = pnand %p291, %p292
      %p294 = pneg %p293
      // Predicated region
      $region9: #{forward.1} parent=5 // pred_check
        _
      $region10: #{forward.1} parent=5 // pred_check_branch
        %296 = sbr.rel (%p293) target = $region12
      $region11: #{forward.1} parent=5 // pred_region
        %s297 = ssub.s32 %s21, 1
        // Predicated region
        $region13: #{forward.1} parent=11 // pred_check
          %p298 = pneg %p42
        $region14: #{forward.1} parent=11 // pred_check_branch
          %300 = sbr.rel (%p298) target = $region16
        $region15: #{forward.1} parent=11 // pred_region
          _
        $region16: #{forward.1} parent=11 // pred_fallthru
          _
        // Predicated region
        $region17: #{forward.1} parent=11 // pred_check
          %p301 = pneg %p115
        $region18: #{forward.1} parent=11 // pred_check_branch
          %303 = sbr.rel (%p301) target = $region20
        $region19: #{forward.1} parent=11 // pred_region
          _
        $region20: #{forward.1} parent=11 // pred_fallthru
          _
        // Predicated region
        $region21: #{forward.1} parent=11 // pred_check
          %p304 = pneg %p136
        $region22: #{forward.1} parent=11 // pred_check_branch
          %306 = sbr.rel (%p304) target = $region24
        $region23: #{forward.1} parent=11 // pred_region
          _
        $region24: #{forward.1} parent=11 // pred_fallthru
          _
        // Predicated region
        $region25: #{forward.1} parent=11 // pred_check
          %p307 = pneg %p157
        $region26: #{forward.1} parent=11 // pred_check_branch
          %309 = sbr.rel (%p307) target = $region28
        $region27: #{forward.1} parent=11 // pred_region
          _
        $region28: #{forward.1} parent=11 // pred_fallthru
          _
        // Predicated region
        $region29: #{forward.1} parent=11 // pred_check
          %p310 = pneg %p178
        $region30: #{forward.1} parent=11 // pred_check_branch
          %312 = sbr.rel (%p310) target = $region32
        $region31: #{forward.1} parent=11 // pred_region
          _
        $region32: #{forward.1} parent=11 // pred_fallthru
          _
        // Predicated region
        $region33: #{forward.1} parent=11 // pred_check
          %p313 = pneg %p199
        $region34: #{forward.1} parent=11 // pred_check_branch
          %315 = sbr.rel (%p313) target = $region36
        $region35: #{forward.1} parent=11 // pred_region
          %s317 = ssub.s32 1024, 1024
          %318 = vsyncadd [#allocation6], %s317
          %s319 = sshll.u32 [#allocation5], 4
          %s320 = int_to_ptr.vmem [resolvable:$true] %s319
          %325 = dma.hbm_to_vmem [thread:$0]  %s7, 1024, %s320, [#allocation6], 128, 128, 8
        $region36: #{forward.1} parent=11 // pred_fallthru
          _
        // Predicated region
        $region37: #{forward.1} parent=11 // pred_check
          %p326 = pneg %p220
        $region38: #{forward.1} parent=11 // pred_check_branch
          %328 = sbr.rel (%p326) target = $region40
        $region39: #{forward.1} parent=11 // pred_region
          _
        $region40: #{forward.1} parent=11 // pred_fallthru
          _
        // Predicated region
        $region41: #{forward.1} parent=11 // pred_check
          %p329 = pneg %p241
        $region42: #{forward.1} parent=11 // pred_check_branch
          %331 = sbr.rel (%p329) target = $region44
        $region43: #{forward.1} parent=11 // pred_region
          _
        $region44: #{forward.1} parent=11 // pred_fallthru
          _
        // Predicated region
        $region45: #{forward.1} parent=11 // pred_check
          %p332 = pneg %p262
        $region46: #{forward.1} parent=11 // pred_check_branch
          %334 = sbr.rel (%p332) target = $region48
        $region47: #{forward.1} parent=11 // pred_region
          _
        $region48: #{forward.1} parent=11 // pred_fallthru
          _
      $region12: #{forward.1} parent=5 // pred_fallthru
        _
      %p335 = scmp.lt.s32.totalorder %s21, 2
      // Predicated region
      $region49: #{forward.1} parent=5 // pred_check
        %p336 = pneg %p335
      $region50: #{forward.1} parent=5 // pred_check_branch
        %338 = sbr.rel (%p336) target = $region52
      $region51: #{forward.1} parent=5 // pred_region
        // Predicated region
        $region53: #{forward.1} parent=51 // pred_check
          %p339 = pneg %p62
        $region54: #{forward.1} parent=51 // pred_check_branch
          %341 = sbr.rel (%p339) target = $region56
        $region55: #{forward.1} parent=51 // pred_region
          %s342 = smul.u32 4, %s21
          %p343 = scmp.lt.s32.totalorder %s342, 7
          %s344 = scalar_select %p343, %s342, 7
          %s345 = smul.addr %s344, 8
          %s346 = scalar_lea.vmem %s1, %s345
          %s347 = smul.u32 4, %s21
        $region56: #{forward.1} parent=51 // pred_fallthru
          _
        // Predicated region
        $region57: #{forward.1} parent=51 // pred_check
          %p348 = pneg %p88
        $region58: #{forward.1} parent=51 // pred_check_branch
          %350 = sbr.rel (%p348) target = $region60
        $region59: #{forward.1} parent=51 // pred_region
          %s351 = sand.u32 %s78, 1
          %s352 = scalar_lea.sflag [#allocation4], %s351
          %s353 = sand.u32 %s78, 1
          %s354 = smul.addr %s353, 512
          %s355 = scalar_lea.vmem [#allocation3], %s354
          %s356 = smul.u32 64, %s21
          %s358 = ssub.s32 8192, 8192
          %359 = vsyncadd %s352, %s358
          %s360 = smul.addr %s356, 128
          %s361 = scalar_lea.hbm %s2, %s360
          %s362 = sshll.u32 %s355, 4
          %s363 = int_to_ptr.vmem [resolvable:$true] %s362
          %368 = dma.hbm_to_vmem [thread:$0]  %s361, 8192, %s363, %s352, 128, 128, 8
        $region60: #{forward.1} parent=51 // pred_fallthru
          _
      $region52: #{forward.1} parent=5 // pred_fallthru
        _
      %p369 = scmp.le.s32.totalorder 1, %s21
      %p370 = scmp.lt.s32.totalorder %s21, 3
      %p371 = pnand %p369, %p370
      %p372 = pneg %p371
      // Predicated region
      $region61: #{forward.1} parent=5 // pred_check
        _
      $region62: #{forward.1} parent=5 // pred_check_branch
        %374 = sbr.rel (%p371) target = $region64
      $region63: #{forward.1} parent=5 // pred_region
        %s375 = ssub.s32 %s21, 1
        %s376 = sand.u32 %s81, 1
        %s377 = scalar_lea.sflag [#allocation4], %s376
        %s378 = sand.u32 %s81, 1
        %s379 = smul.addr %s378, 512
        %s380 = scalar_lea.vmem [#allocation3], %s379
        // Predicated region
        $region65: #{forward.1} parent=63 // pred_check
          %p381 = pneg %p94
        $region66: #{forward.1} parent=63 // pred_check_branch
          %383 = sbr.rel (%p381) target = $region68
        $region67: #{forward.1} parent=63 // pred_region
          %384 = dma.done %s377, 8192
        $region68: #{forward.1} parent=63 // pred_fallthru
          _
        // Predicated region
        $region69: #{forward.1} parent=63 // pred_check
          %p385 = pneg %p199
        $region70: #{forward.1} parent=63 // pred_check_branch
          %387 = sbr.rel (%p385) target = $region72
        $region71: #{forward.1} parent=63 // pred_region
          %388 = dma.done [#allocation6], 1024
        $region72: #{forward.1} parent=63 // pred_fallthru
          _
        %p389 = pneg %p42
        %p390 = pneg %p39
        %s391 = smul.u32 4, %s26
        %p392 = scmp.lt.s32.totalorder %s391, 7
        %s393 = scalar_select %p392, %s391, 7
        %s394 = smul.addr %s393, 8
        %s395 = scalar_lea.vmem %s1, %s394
        %p396 = pneg %p68
        %p397 = pneg %p65
        %s398 = sand.u32 %s81, 1
        %s399 = scalar_lea.sflag [#allocation4], %s398
        %s400 = sand.u32 %s81, 1
        %s401 = smul.addr %s400, 512
        %s402 = scalar_lea.vmem [#allocation3], %s401
        %p403 = pneg %p94
        %p404 = pneg %p91
        %p405 = pneg %p115
        %p406 = pneg %p112
        %p407 = pneg %p136
        %p408 = pneg %p133
        %p409 = pneg %p157
        %p410 = pneg %p154
        %p411 = pneg %p178
        %p412 = pneg %p175
        %p413 = pneg %p199
        %p414 = pneg %p196
        %p415 = pneg %p220
        %p416 = pneg %p217
        %p417 = pneg %p241
        %p418 = pneg %p238
        %p419 = pneg %p262
        %p420 = pneg %p259
        %p421 = pneg %p283
        %p422 = pneg %p280
        %s423 = smul.u32 4, %s26
        %p424 = scmp.lt.s32.totalorder %s423, 7
        %s425 = scalar_select %p424, %s423, 7
        %s426 = smul.addr %s425, 8
        %s427 = scalar_lea.vmem %s1, %s426
        %s428 = smul.u32 4, %s26
        %s429 = smul.u32 64, %s26
        %p430 = scmp.eq.s32.totalorder %s26, 0
        // Predicated region
        $region73: #{forward.1} parent=63 // pred_check
          %p431 = pneg %p430
        $region74: #{forward.1} parent=63 // pred_check_branch
          %433 = sbr.rel (%p431) target = $region76
        $region75: #{forward.1} parent=63 // pred_region
          %v434 = vld [vmem:[%s0] sm:$0xff]
          %v435 = vld [vmem:[%s3] sm:$0xff]
          %v436 = vld [vmem:[%s4] sm:$0x1]
          %v438 = vlaneseq
          %v439 = vshrl.u32 %v438, 7
          %v440 = vsub.s32 0, %v439
          %v441 = vrot.slane %v436, %v440
          %vm443 = vcmask 64512
          %v445 = vsel %vm443, %v434, 0
          %447 = vmatprep.subr.mxu0 0.0
          %448 = vmatpush1.msra.mxu0 %v435
          %449 = vmatprep.subr.mxu0 0.0
          %450 = vmatpush1.msra.mxu0 0.0
          %451 = vmatprep.subr.mxu0 0.0
          %452 = vmatpush1.msra.mxu0 0.0
          %453 = vmatprep.subr.mxu0 0.0
          %454 = vmatpush1.msra.mxu0 0.0
          %455 = vmatprep.subr.mxu0 0.0
          %456 = vmatpush1.msra.mxu0 0.0
          %457 = vmatprep.subr.mxu0 0.0
          %458 = vmatpush1.msra.mxu0 0.0
          %459 = vmatprep.subr.mxu0 0.0
          %460 = vmatpush1.msra.mxu0 0.0
          %461 = vmatprep.subr.mxu0 0.0
          %462 = vmatpush1.msra.mxu0 0.0
          %463 = vmatprep.subr.mxu0 0.0
          %464 = vmatpush1.msra.mxu0 0.0
          %465 = vmatprep.subr.mxu0 0.0
          %466 = vmatpush1.msra.mxu0 0.0
          %467 = vmatprep.subr.mxu0 0.0
          %468 = vmatpush1.msra.mxu0 0.0
          %469 = vmatprep.subr.mxu0 0.0
          %470 = vmatpush1.msra.mxu0 0.0
          %471 = vmatprep.subr.mxu0 0.0
          %472 = vmatpush1.msra.mxu0 0.0
          %473 = vmatprep.subr.mxu0 0.0
          %474 = vmatpush1.msra.mxu0 0.0
          %475 = vmatprep.subr.mxu0 0.0
          %476 = vmatpush1.msra.mxu0 0.0
          %477 = vmatprep.subr.mxu0 0.0
          %478 = vmatpush1.msra.mxu0 0.0
          %479 = vmatprep.subr.mxu0 0.0
          %480 = vmatpush1.msra.mxu0 0.0
          %481 = vmatprep.subr.mxu0 0.0
          %482 = vmatpush1.msra.mxu0 0.0
          %483 = vmatprep.subr.mxu0 0.0
          %484 = vmatpush1.msra.mxu0 0.0
          %485 = vmatprep.subr.mxu0 0.0
          %486 = vmatpush1.msra.mxu0 0.0
          %487 = vmatprep.subr.mxu0 0.0
          %488 = vmatpush1.msra.mxu0 0.0
          %489 = vmatprep.subr.mxu0 0.0
          %490 = vmatpush1.msra.mxu0 0.0
          %491 = vmatprep.subr.mxu0 0.0
          %492 = vmatpush1.msra.mxu0 0.0
          %493 = vmatprep.subr.mxu0 0.0
          %494 = vmatpush1.msra.mxu0 0.0
          %495 = vmatprep.subr.mxu0 0.0
          %496 = vmatpush1.msra.mxu0 0.0
          %497 = vmatprep.subr.mxu0 0.0
          %498 = vmatpush1.msra.mxu0 0.0
          %499 = vmatprep.subr.mxu0 0.0
          %500 = vmatpush1.msra.mxu0 0.0
          %501 = vmatprep.subr.mxu0 0.0
          %502 = vmatpush1.msra.mxu0 0.0
          %503 = vmatprep.subr.mxu0 0.0
          %504 = vmatpush1.msra.mxu0 0.0
          %505 = vmatprep.subr.mxu0 0.0
          %506 = vmatpush1.msra.mxu0 0.0
          %507 = vmatprep.subr.mxu0 0.0
          %508 = vmatpush1.msra.mxu0 0.0
          %509 = vmatprep.subr.mxu0 0.0
          %510 = vmatpush1.msra.mxu0 0.0
          %511 = vmatprep.mubr.f32.mxu0 0.0
          %512 = vmatmul.mubr.f32.gmra.mrb[0].mxu0 %v445
          %v513 = vpop.f32.mrb[0].mxu0
          %v514 = vadd.f32 %v441, %v513
          %v515 = vpop.f32.mrb[0].mxu0
          %516 = vdwg.mxu0
          %v517 = vmax.f32 %v514, 0.0
          %v518 = vld [vmem:[%s5] sm:$0xff]
          %v519 = vld [vmem:[%s5 + $0x8] sm:$0xff]
          %v520 = vld [vmem:[%s5 + $0x10] sm:$0xff]
          %v521 = vld [vmem:[%s5 + $0x18] sm:$0xff]
          %v522 = vld [vmem:[%s5 + $0x20] sm:$0xff]
          %v523 = vld [vmem:[%s5 + $0x28] sm:$0xff]
          %v524 = vld [vmem:[%s5 + $0x30] sm:$0xff]
          %v525 = vld [vmem:[%s5 + $0x38] sm:$0xff]
          %v526 = vld [vmem:[%s6] sm:$0x1]
          %v528 = vlaneseq
          %v529 = vshrl.u32 %v528, 7
          %v530 = vsub.s32 0, %v529
          %v531 = vrot.slane %v526, %v530
          %vm533 = vcmask 523264
          %v535 = vsel %vm533, %v517, 0
          %537 = vmatprep.subr.mxu0 0.0
          %538 = vmatpush1.msra.mxu0 %v518
          %539 = vmatprep.subr.mxu0 0.0
          %540 = vmatpush1.msra.mxu0 %v519
          %541 = vmatprep.subr.mxu0 0.0
          %542 = vmatpush1.msra.mxu0 %v520
          %543 = vmatprep.subr.mxu0 0.0
          %544 = vmatpush1.msra.mxu0 %v521
          %545 = vmatprep.subr.mxu0 0.0
          %546 = vmatpush1.msra.mxu0 %v522
          %547 = vmatprep.subr.mxu0 0.0
          %548 = vmatpush1.msra.mxu0 %v523
          %549 = vmatprep.subr.mxu0 0.0
          %550 = vmatpush1.msra.mxu0 %v524
          %551 = vmatprep.subr.mxu0 0.0
          %552 = vmatpush1.msra.mxu0 %v525
          %553 = vmatprep.subr.mxu0 0.0
          %554 = vmatpush1.msra.mxu0 0.0
          %555 = vmatprep.subr.mxu0 0.0
          %556 = vmatpush1.msra.mxu0 0.0
          %557 = vmatprep.subr.mxu0 0.0
          %558 = vmatpush1.msra.mxu0 0.0
          %559 = vmatprep.subr.mxu0 0.0
          %560 = vmatpush1.msra.mxu0 0.0
          %561 = vmatprep.subr.mxu0 0.0
          %562 = vmatpush1.msra.mxu0 0.0
          %563 = vmatprep.subr.mxu0 0.0
          %564 = vmatpush1.msra.mxu0 0.0
          %565 = vmatprep.subr.mxu0 0.0
          %566 = vmatpush1.msra.mxu0 0.0
          %567 = vmatprep.subr.mxu0 0.0
          %568 = vmatpush1.msra.mxu0 0.0
          %569 = vmatprep.subr.mxu0 0.0
          %570 = vmatpush1.msra.mxu0 0.0
          %571 = vmatprep.subr.mxu0 0.0
          %572 = vmatpush1.msra.mxu0 0.0
          %573 = vmatprep.subr.mxu0 0.0
          %574 = vmatpush1.msra.mxu0 0.0
          %575 = vmatprep.subr.mxu0 0.0
          %576 = vmatpush1.msra.mxu0 0.0
          %577 = vmatprep.subr.mxu0 0.0
          %578 = vmatpush1.msra.mxu0 0.0
          %579 = vmatprep.subr.mxu0 0.0
          %580 = vmatpush1.msra.mxu0 0.0
          %581 = vmatprep.subr.mxu0 0.0
          %582 = vmatpush1.msra.mxu0 0.0
          %583 = vmatprep.subr.mxu0 0.0
          %584 = vmatpush1.msra.mxu0 0.0
          %585 = vmatprep.subr.mxu0 0.0
          %586 = vmatpush1.msra.mxu0 0.0
          %587 = vmatprep.subr.mxu0 0.0
          %588 = vmatpush1.msra.mxu0 0.0
          %589 = vmatprep.subr.mxu0 0.0
          %590 = vmatpush1.msra.mxu0 0.0
          %591 = vmatprep.subr.mxu0 0.0
          %592 = vmatpush1.msra.mxu0 0.0
          %593 = vmatprep.subr.mxu0 0.0
          %594 = vmatpush1.msra.mxu0 0.0
          %595 = vmatprep.subr.mxu0 0.0
          %596 = vmatpush1.msra.mxu0 0.0
          %597 = vmatprep.subr.mxu0 0.0
          %598 = vmatpush1.msra.mxu0 0.0
          %599 = vmatprep.subr.mxu0 0.0
          %600 = vmatpush1.msra.mxu0 0.0
          %601 = vmatprep.mubr.f32.mxu0 0.0
          %602 = vmatmul.mubr.f32.gmra.mrb[0].mxu0 %v535
          %v603 = vpop.f32.mrb[0].mxu0
          %v604 = vadd.f32 %v531, %v603
          %v605 = vpop.f32.mrb[0].mxu0
          %606 = vdwg.mxu0
          %v607 = vld [vmem:[#allocation5] sm:$0xff]
          %v608 = vld [vmem:[#allocation5 + $0x8] sm:$0xff]
          %v609 = vld [vmem:[#allocation5 + $0x10] sm:$0xff]
          %v610 = vld [vmem:[#allocation5 + $0x18] sm:$0xff]
          %v611 = vld [vmem:[#allocation5 + $0x20] sm:$0xff]
          %v612 = vld [vmem:[#allocation5 + $0x28] sm:$0xff]
          %v613 = vld [vmem:[#allocation5 + $0x30] sm:$0xff]
          %v614 = vld [vmem:[#allocation5 + $0x38] sm:$0xff]
          %v615 = vld [vmem:[%s8] sm:$0x1]
          %v617 = vlaneseq
          %v618 = vshrl.u32 %v617, 7
          %v619 = vsub.s32 0, %v618
          %v620 = vrot.slane %v615, %v619
          %v623 = vsel %vm533, %v604, 0
          %625 = vmatprep.subr.mxu0 0.0
          %626 = vmatpush1.msra.mxu0 %v607
          %627 = vmatprep.subr.mxu0 0.0
          %628 = vmatpush1.msra.mxu0 %v608
          %629 = vmatprep.subr.mxu0 0.0
          %630 = vmatpush1.msra.mxu0 %v609
          %631 = vmatprep.subr.mxu0 0.0
          %632 = vmatpush1.msra.mxu0 %v610
          %633 = vmatprep.subr.mxu0 0.0
          %634 = vmatpush1.msra.mxu0 %v611
          %635 = vmatprep.subr.mxu0 0.0
          %636 = vmatpush1.msra.mxu0 %v612
          %637 = vmatprep.subr.mxu0 0.0
          %638 = vmatpush1.msra.mxu0 %v613
          %639 = vmatprep.subr.mxu0 0.0
          %640 = vmatpush1.msra.mxu0 %v614
          %641 = vmatprep.subr.mxu0 0.0
          %642 = vmatpush1.msra.mxu0 0.0
          %643 = vmatprep.subr.mxu0 0.0
          %644 = vmatpush1.msra.mxu0 0.0
          %645 = vmatprep.subr.mxu0 0.0
          %646 = vmatpush1.msra.mxu0 0.0
          %647 = vmatprep.subr.mxu0 0.0
          %648 = vmatpush1.msra.mxu0 0.0
          %649 = vmatprep.subr.mxu0 0.0
          %650 = vmatpush1.msra.mxu0 0.0
          %651 = vmatprep.subr.mxu0 0.0
          %652 = vmatpush1.msra.mxu0 0.0
          %653 = vmatprep.subr.mxu0 0.0
          %654 = vmatpush1.msra.mxu0 0.0
          %655 = vmatprep.subr.mxu0 0.0
          %656 = vmatpush1.msra.mxu0 0.0
          %657 = vmatprep.subr.mxu0 0.0
          %658 = vmatpush1.msra.mxu0 0.0
          %659 = vmatprep.subr.mxu0 0.0
          %660 = vmatpush1.msra.mxu0 0.0
          %661 = vmatprep.subr.mxu0 0.0
          %662 = vmatpush1.msra.mxu0 0.0
          %663 = vmatprep.subr.mxu0 0.0
          %664 = vmatpush1.msra.mxu0 0.0
          %665 = vmatprep.subr.mxu0 0.0
          %666 = vmatpush1.msra.mxu0 0.0
          %667 = vmatprep.subr.mxu0 0.0
          %668 = vmatpush1.msra.mxu0 0.0
          %669 = vmatprep.subr.mxu0 0.0
          %670 = vmatpush1.msra.mxu0 0.0
          %671 = vmatprep.subr.mxu0 0.0
          %672 = vmatpush1.msra.mxu0 0.0
          %673 = vmatprep.subr.mxu0 0.0
          %674 = vmatpush1.msra.mxu0 0.0
          %675 = vmatprep.subr.mxu0 0.0
          %676 = vmatpush1.msra.mxu0 0.0
          %677 = vmatprep.subr.mxu0 0.0
          %678 = vmatpush1.msra.mxu0 0.0
          %679 = vmatprep.subr.mxu0 0.0
          %680 = vmatpush1.msra.mxu0 0.0
          %681 = vmatprep.subr.mxu0 0.0
          %682 = vmatpush1.msra.mxu0 0.0
          %683 = vmatprep.subr.mxu0 0.0
          %684 = vmatpush1.msra.mxu0 0.0
          %685 = vmatprep.subr.mxu0 0.0
          %686 = vmatpush1.msra.mxu0 0.0
          %687 = vmatprep.subr.mxu0 0.0
          %688 = vmatpush1.msra.mxu0 0.0
          %689 = vmatprep.mubr.f32.mxu0 0.0
          %690 = vmatmul.mubr.f32.gmra.mrb[0].mxu0 %v623
          %v691 = vpop.f32.mrb[0].mxu0
          %v692 = vadd.f32 %v620, %v691
          %v693 = vpop.f32.mrb[0].mxu0
          %694 = vdwg.mxu0
          %695 = vst [vmem:[#allocation2] sm:$0xff] %v692
        $region76: #{forward.1} parent=63 // pred_fallthru
          _
        %v696 = vld [vmem:[%s427] sm:$0xff]
        %v697 = vld [vmem:[%s427 + $0x8] sm:$0xff]
        %v698 = vld [vmem:[%s427 + $0x10] sm:$0xff]
        %v699 = vld [vmem:[%s427 + $0x18] sm:$0xff]
        %v700 = vld [vmem:[%s380] sm:$0xff]
        %v701 = vld [vmem:[%s380 + $0x8] sm:$0xff]
        %v702 = vld [vmem:[%s380 + $0x10] sm:$0xff]
        %v703 = vld [vmem:[%s380 + $0x18] sm:$0xff]
        %v704 = vld [vmem:[%s380 + $0x20] sm:$0xff]
        %v705 = vld [vmem:[%s380 + $0x28] sm:$0xff]
        %v706 = vld [vmem:[%s380 + $0x30] sm:$0xff]
        %v707 = vld [vmem:[%s380 + $0x38] sm:$0xff]
        %v708 = vld [vmem:[%s380 + $0x40] sm:$0xff]
        %v709 = vld [vmem:[%s380 + $0x48] sm:$0xff]
        %v710 = vld [vmem:[%s380 + $0x50] sm:$0xff]
        %v711 = vld [vmem:[%s380 + $0x58] sm:$0xff]
        %v712 = vld [vmem:[%s380 + $0x60] sm:$0xff]
        %v713 = vld [vmem:[%s380 + $0x68] sm:$0xff]
        %v714 = vld [vmem:[%s380 + $0x70] sm:$0xff]
        %v715 = vld [vmem:[%s380 + $0x78] sm:$0xff]
        %v716 = vld [vmem:[%s380 + $0x80] sm:$0xff]
        %v717 = vld [vmem:[%s380 + $0x88] sm:$0xff]
        %v718 = vld [vmem:[%s380 + $0x90] sm:$0xff]
        %v719 = vld [vmem:[%s380 + $0x98] sm:$0xff]
        %v720 = vld [vmem:[%s380 + $0xa0] sm:$0xff]
        %v721 = vld [vmem:[%s380 + $0xa8] sm:$0xff]
        %v722 = vld [vmem:[%s380 + $0xb0] sm:$0xff]
        %v723 = vld [vmem:[%s380 + $0xb8] sm:$0xff]
        %v724 = vld [vmem:[%s380 + $0xc0] sm:$0xff]
        %v725 = vld [vmem:[%s380 + $0xc8] sm:$0xff]
        %v726 = vld [vmem:[%s380 + $0xd0] sm:$0xff]
        %v727 = vld [vmem:[%s380 + $0xd8] sm:$0xff]
        %v728 = vld [vmem:[%s380 + $0xe0] sm:$0xff]
        %v729 = vld [vmem:[%s380 + $0xe8] sm:$0xff]
        %v730 = vld [vmem:[%s380 + $0xf0] sm:$0xff]
        %v731 = vld [vmem:[%s380 + $0xf8] sm:$0xff]
        %v732 = vld [vmem:[%s380 + $0x100] sm:$0xff]
        %v733 = vld [vmem:[%s380 + $0x108] sm:$0xff]
        %v734 = vld [vmem:[%s380 + $0x110] sm:$0xff]
        %v735 = vld [vmem:[%s380 + $0x118] sm:$0xff]
        %v736 = vld [vmem:[%s380 + $0x120] sm:$0xff]
        %v737 = vld [vmem:[%s380 + $0x128] sm:$0xff]
        %v738 = vld [vmem:[%s380 + $0x130] sm:$0xff]
        %v739 = vld [vmem:[%s380 + $0x138] sm:$0xff]
        %v740 = vld [vmem:[%s380 + $0x140] sm:$0xff]
        %v741 = vld [vmem:[%s380 + $0x148] sm:$0xff]
        %v742 = vld [vmem:[%s380 + $0x150] sm:$0xff]
        %v743 = vld [vmem:[%s380 + $0x158] sm:$0xff]
        %v744 = vld [vmem:[%s380 + $0x160] sm:$0xff]
        %v745 = vld [vmem:[%s380 + $0x168] sm:$0xff]
        %v746 = vld [vmem:[%s380 + $0x170] sm:$0xff]
        %v747 = vld [vmem:[%s380 + $0x178] sm:$0xff]
        %v748 = vld [vmem:[%s380 + $0x180] sm:$0xff]
        %v749 = vld [vmem:[%s380 + $0x188] sm:$0xff]
        %v750 = vld [vmem:[%s380 + $0x190] sm:$0xff]
        %v751 = vld [vmem:[%s380 + $0x198] sm:$0xff]
        %v752 = vld [vmem:[%s380 + $0x1a0] sm:$0xff]
        %v753 = vld [vmem:[%s380 + $0x1a8] sm:$0xff]
        %v754 = vld [vmem:[%s380 + $0x1b0] sm:$0xff]
        %v755 = vld [vmem:[%s380 + $0x1b8] sm:$0xff]
        %v756 = vld [vmem:[%s380 + $0x1c0] sm:$0xff]
        %v757 = vld [vmem:[%s380 + $0x1c8] sm:$0xff]
        %v758 = vld [vmem:[%s380 + $0x1d0] sm:$0xff]
        %v759 = vld [vmem:[%s380 + $0x1d8] sm:$0xff]
        %v760 = vld [vmem:[%s380 + $0x1e0] sm:$0xff]
        %v761 = vld [vmem:[%s380 + $0x1e8] sm:$0xff]
        %v762 = vld [vmem:[%s380 + $0x1f0] sm:$0xff]
        %v763 = vld [vmem:[%s380 + $0x1f8] sm:$0xff]
        %v764 = vld [vmem:[#allocation2] sm:$0xff]
        %765 = vmatprep.subr.mxu0 0.0
        %766 = vmatpush1.msra.mxu0 %v700
        %767 = vmatprep.subr.mxu0 0.0
        %768 = vmatpush1.msra.mxu0 %v701
        %769 = vmatprep.subr.mxu0 0.0
        %770 = vmatpush1.msra.mxu0 %v702
        %771 = vmatprep.subr.mxu0 0.0
        %772 = vmatpush1.msra.mxu0 %v703
        %773 = vmatprep.subr.mxu0 0.0
        %774 = vmatpush1.msra.mxu0 %v704
        %775 = vmatprep.subr.mxu0 0.0
        %776 = vmatpush1.msra.mxu0 %v705
        %777 = vmatprep.subr.mxu0 0.0
        %778 = vmatpush1.msra.mxu0 %v706
        %779 = vmatprep.subr.mxu0 0.0
        %780 = vmatpush1.msra.mxu0 %v707
        %781 = vmatprep.subr.mxu0 0.0
        %782 = vmatpush1.msra.mxu0 %v708
        %783 = vmatprep.subr.mxu0 0.0
        %784 = vmatpush1.msra.mxu0 %v709
        %785 = vmatprep.subr.mxu0 0.0
        %786 = vmatpush1.msra.mxu0 %v710
        %787 = vmatprep.subr.mxu0 0.0
        %788 = vmatpush1.msra.mxu0 %v711
        %789 = vmatprep.subr.mxu0 0.0
        %790 = vmatpush1.msra.mxu0 %v712
        %791 = vmatprep.subr.mxu0 0.0
        %792 = vmatpush1.msra.mxu0 %v713
        %793 = vmatprep.subr.mxu0 0.0
        %794 = vmatpush1.msra.mxu0 %v714
        %795 = vmatprep.subr.mxu0 0.0
        %796 = vmatpush1.msra.mxu0 %v715
        %797 = vmatprep.subr.mxu0 0.0
        %798 = vmatpush1.msra.mxu0 %v716
        %799 = vmatprep.subr.mxu0 0.0
        %800 = vmatpush1.msra.mxu0 %v717
        %801 = vmatprep.subr.mxu0 0.0
        %802 = vmatpush1.msra.mxu0 %v718
        %803 = vmatprep.subr.mxu0 0.0
        %804 = vmatpush1.msra.mxu0 %v719
        %805 = vmatprep.subr.mxu0 0.0
        %806 = vmatpush1.msra.mxu0 %v720
        %807 = vmatprep.subr.mxu0 0.0
        %808 = vmatpush1.msra.mxu0 %v721
        %809 = vmatprep.subr.mxu0 0.0
        %810 = vmatpush1.msra.mxu0 %v722
        %811 = vmatprep.subr.mxu0 0.0
        %812 = vmatpush1.msra.mxu0 %v723
        %813 = vmatprep.subr.mxu0 0.0
        %814 = vmatpush1.msra.mxu0 %v724
        %815 = vmatprep.subr.mxu0 0.0
        %816 = vmatpush1.msra.mxu0 %v725
        %817 = vmatprep.subr.mxu0 0.0
        %818 = vmatpush1.msra.mxu0 %v726
        %819 = vmatprep.subr.mxu0 0.0
        %820 = vmatpush1.msra.mxu0 %v727
        %821 = vmatprep.subr.mxu0 0.0
        %822 = vmatpush1.msra.mxu0 %v728
        %823 = vmatprep.subr.mxu0 0.0
        %824 = vmatpush1.msra.mxu0 %v729
        %825 = vmatprep.subr.mxu0 0.0
        %826 = vmatpush1.msra.mxu0 %v730
        %827 = vmatprep.subr.mxu0 0.0
        %828 = vmatpush1.msra.mxu0 %v731
        %829 = vmatprep.mubr.f32.mxu0 %v697
        %830 = vmatmul.mubr.f32.gmra.mrb[0].mxu0 %v696
        %v831 = vpop.f32.mrb[0].mxu0
        %v832 = vadd.f32 0.0, %v831
        %v833 = vpop.f32.mrb[0].mxu0
        %834 = vdwg.mxu0
        %835 = vmatprep.subr.mxu0 0.0
        %836 = vmatpush1.msra.mxu0 %v732
        %837 = vmatprep.subr.mxu0 0.0
        %838 = vmatpush1.msra.mxu0 %v733
        %839 = vmatprep.subr.mxu0 0.0
        %840 = vmatpush1.msra.mxu0 %v734
        %841 = vmatprep.subr.mxu0 0.0
        %842 = vmatpush1.msra.mxu0 %v735
        %843 = vmatprep.subr.mxu0 0.0
        %844 = vmatpush1.msra.mxu0 %v736
        %845 = vmatprep.subr.mxu0 0.0
        %846 = vmatpush1.msra.mxu0 %v737
        %847 = vmatprep.subr.mxu0 0.0
        %848 = vmatpush1.msra.mxu0 %v738
        %849 = vmatprep.subr.mxu0 0.0
        %850 = vmatpush1.msra.mxu0 %v739
        %851 = vmatprep.subr.mxu0 0.0
        %852 = vmatpush1.msra.mxu0 %v740
        %853 = vmatprep.subr.mxu0 0.0
        %854 = vmatpush1.msra.mxu0 %v741
        %855 = vmatprep.subr.mxu0 0.0
        %856 = vmatpush1.msra.mxu0 %v742
        %857 = vmatprep.subr.mxu0 0.0
        %858 = vmatpush1.msra.mxu0 %v743
        %859 = vmatprep.subr.mxu0 0.0
        %860 = vmatpush1.msra.mxu0 %v744
        %861 = vmatprep.subr.mxu0 0.0
        %862 = vmatpush1.msra.mxu0 %v745
        %863 = vmatprep.subr.mxu0 0.0
        %864 = vmatpush1.msra.mxu0 %v746
        %865 = vmatprep.subr.mxu0 0.0
        %866 = vmatpush1.msra.mxu0 %v747
        %867 = vmatprep.subr.mxu0 0.0
        %868 = vmatpush1.msra.mxu0 %v748
        %869 = vmatprep.subr.mxu0 0.0
        %870 = vmatpush1.msra.mxu0 %v749
        %871 = vmatprep.subr.mxu0 0.0
        %872 = vmatpush1.msra.mxu0 %v750
        %873 = vmatprep.subr.mxu0 0.0
        %874 = vmatpush1.msra.mxu0 %v751
        %875 = vmatprep.subr.mxu0 0.0
        %876 = vmatpush1.msra.mxu0 %v752
        %877 = vmatprep.subr.mxu0 0.0
        %878 = vmatpush1.msra.mxu0 %v753
        %879 = vmatprep.subr.mxu0 0.0
        %880 = vmatpush1.msra.mxu0 %v754
        %881 = vmatprep.subr.mxu0 0.0
        %882 = vmatpush1.msra.mxu0 %v755
        %883 = vmatprep.subr.mxu0 0.0
        %884 = vmatpush1.msra.mxu0 %v756
        %885 = vmatprep.subr.mxu0 0.0
        %886 = vmatpush1.msra.mxu0 %v757
        %887 = vmatprep.subr.mxu0 0.0
        %888 = vmatpush1.msra.mxu0 %v758
        %889 = vmatprep.subr.mxu0 0.0
        %890 = vmatpush1.msra.mxu0 %v759
        %891 = vmatprep.subr.mxu0 0.0
        %892 = vmatpush1.msra.mxu0 %v760
        %893 = vmatprep.subr.mxu0 0.0
        %894 = vmatpush1.msra.mxu0 %v761
        %895 = vmatprep.subr.mxu0 0.0
        %896 = vmatpush1.msra.mxu0 %v762
        %897 = vmatprep.subr.mxu0 0.0
        %898 = vmatpush1.msra.mxu0 %v763
        %899 = vmatprep.mubr.f32.mxu0 %v699
        %900 = vmatmul.mubr.f32.gmra.mrb[0].mxu0 %v698
        %v901 = vpop.f32.mrb[0].mxu0
        %v902 = vadd.f32 %v832, %v901
        %v903 = vpop.f32.mrb[0].mxu0
        %904 = vdwg.mxu0
        %v905 = vadd.f32 %v764, %v902
        %906 = vst [vmem:[#allocation2] sm:$0xff] %v905
        %p907 = scmp.eq.s32.totalorder %s26, 1
        // Predicated region
        $region77: #{forward.1} parent=63 // pred_check
          %p908 = pneg %p907
        $region78: #{forward.1} parent=63 // pred_check_branch
          %910 = sbr.rel (%p908) target = $region80
        $region79: #{forward.1} parent=63 // pred_region
          %v911 = vld [vmem:[#allocation2] sm:$0xff]
          %v912 = vmax.f32 %v911, 0.0
          %v913 = vld [vmem:[%s9] sm:$0xff]
          %v914 = vld [vmem:[%s9 + $0x8] sm:$0xff]
          %v915 = vld [vmem:[%s9 + $0x10] sm:$0xff]
          %v916 = vld [vmem:[%s9 + $0x18] sm:$0xff]
          %v917 = vld [vmem:[%s9 + $0x20] sm:$0xff]
          %v918 = vld [vmem:[%s9 + $0x28] sm:$0xff]
          %v919 = vld [vmem:[%s9 + $0x30] sm:$0xff]
          %v920 = vld [vmem:[%s9 + $0x38] sm:$0xff]
          %v921 = vld [vmem:[%s9 + $0x40] sm:$0xff]
          %v922 = vld [vmem:[%s9 + $0x48] sm:$0xff]
          %v923 = vld [vmem:[%s9 + $0x50] sm:$0xff]
          %v924 = vld [vmem:[%s9 + $0x58] sm:$0xff]
          %v925 = vld [vmem:[%s9 + $0x60] sm:$0xff]
          %v926 = vld [vmem:[%s9 + $0x68] sm:$0xff]
          %v927 = vld [vmem:[%s9 + $0x70] sm:$0xff]
          %v928 = vld [vmem:[%s9 + $0x78] sm:$0xff]
          %v929 = vld [vmem:[%s10] sm:$0x1]
          %v931 = vlaneseq
          %v932 = vshrl.u32 %v931, 7
          %v933 = vsub.s32 0, %v932
          %v934 = vrot.slane %v929, %v933
          %936 = vmatprep.subr.mxu0 0.0
          %937 = vmatpush1.msra.mxu0 %v913
          %938 = vmatprep.subr.mxu0 0.0
          %939 = vmatpush1.msra.mxu0 %v914
          %940 = vmatprep.subr.mxu0 0.0
          %941 = vmatpush1.msra.mxu0 %v915
          %942 = vmatprep.subr.mxu0 0.0
          %943 = vmatpush1.msra.mxu0 %v916
          %944 = vmatprep.subr.mxu0 0.0
          %945 = vmatpush1.msra.mxu0 %v917
          %946 = vmatprep.subr.mxu0 0.0
          %947 = vmatpush1.msra.mxu0 %v918
          %948 = vmatprep.subr.mxu0 0.0
          %949 = vmatpush1.msra.mxu0 %v919
          %950 = vmatprep.subr.mxu0 0.0
          %951 = vmatpush1.msra.mxu0 %v920
          %952 = vmatprep.subr.mxu0 0.0
          %953 = vmatpush1.msra.mxu0 %v921
          %954 = vmatprep.subr.mxu0 0.0
          %955 = vmatpush1.msra.mxu0 %v922
          %956 = vmatprep.subr.mxu0 0.0
          %957 = vmatpush1.msra.mxu0 %v923
          %958 = vmatprep.subr.mxu0 0.0
          %959 = vmatpush1.msra.mxu0 %v924
          %960 = vmatprep.subr.mxu0 0.0
          %961 = vmatpush1.msra.mxu0 %v925
          %962 = vmatprep.subr.mxu0 0.0
          %963 = vmatpush1.msra.mxu0 %v926
          %964 = vmatprep.subr.mxu0 0.0
          %965 = vmatpush1.msra.mxu0 %v927
          %966 = vmatprep.subr.mxu0 0.0
          %967 = vmatpush1.msra.mxu0 %v928
          %968 = vmatprep.subr.mxu0 0.0
          %969 = vmatpush1.msra.mxu0 0.0
          %970 = vmatprep.subr.mxu0 0.0
          %971 = vmatpush1.msra.mxu0 0.0
          %972 = vmatprep.subr.mxu0 0.0
          %973 = vmatpush1.msra.mxu0 0.0
          %974 = vmatprep.subr.mxu0 0.0
          %975 = vmatpush1.msra.mxu0 0.0
          %976 = vmatprep.subr.mxu0 0.0
          %977 = vmatpush1.msra.mxu0 0.0
          %978 = vmatprep.subr.mxu0 0.0
          %979 = vmatpush1.msra.mxu0 0.0
          %980 = vmatprep.subr.mxu0 0.0
          %981 = vmatpush1.msra.mxu0 0.0
          %982 = vmatprep.subr.mxu0 0.0
          %983 = vmatpush1.msra.mxu0 0.0
          %984 = vmatprep.subr.mxu0 0.0
          %985 = vmatpush1.msra.mxu0 0.0
          %986 = vmatprep.subr.mxu0 0.0
          %987 = vmatpush1.msra.mxu0 0.0
          %988 = vmatprep.subr.mxu0 0.0
          %989 = vmatpush1.msra.mxu0 0.0
          %990 = vmatprep.subr.mxu0 0.0
          %991 = vmatpush1.msra.mxu0 0.0
          %992 = vmatprep.subr.mxu0 0.0
          %993 = vmatpush1.msra.mxu0 0.0
          %994 = vmatprep.subr.mxu0 0.0
          %995 = vmatpush1.msra.mxu0 0.0
          %996 = vmatprep.subr.mxu0 0.0
          %997 = vmatpush1.msra.mxu0 0.0
          %998 = vmatprep.subr.mxu0 0.0
          %999 = vmatpush1.msra.mxu0 0.0
          %1000 = vmatprep.mubr.f32.mxu0 0.0
          %1001 = vmatmul.mubr.f32.gmra.mrb[0].mxu0 %v912
          %v1002 = vpop.f32.mrb[0].mxu0
          %v1003 = vadd.f32 %v934, %v1002
          %v1004 = vpop.f32.mrb[0].mxu0
          %1005 = vdwg.mxu0
          %1006 = vst [vmem:[%s11] sm:$0xff] %v1003
        $region80: #{forward.1} parent=63 // pred_fallthru
          _
        // Predicated region
        $region81: #{forward.1} parent=63 // pred_check
          %p1007 = pneg %p280
        $region82: #{forward.1} parent=63 // pred_check_branch
          %1009 = sbr.rel (%p1007) target = $region84
        $region83: #{forward.1} parent=63 // pred_region
          _
        $region84: #{forward.1} parent=63 // pred_fallthru
          _
        // Predicated region
        $region85: #{forward.1} parent=63 // pred_check
          %p1010 = pneg %p280
        $region86: #{forward.1} parent=63 // pred_check_branch
          %1012 = sbr.rel (%p1010) target = $region88
        $region87: #{forward.1} parent=63 // pred_region
          _
        $region88: #{forward.1} parent=63 // pred_fallthru
          _
      $region64: #{forward.1} parent=5 // pred_fallthru
        _
      %p1013 = scmp.le.s32.totalorder 2, %s21
      // Predicated region
      $region89: #{forward.1} parent=5 // pred_check
        %p1014 = pneg %p1013
      $region90: #{forward.1} parent=5 // pred_check_branch
        %1016 = sbr.rel (%p1014) target = $region92
      $region91: #{forward.1} parent=5 // pred_region
        %s1017 = ssub.s32 %s21, 2
      $region92: #{forward.1} parent=5 // pred_fallthru
        _
    $region6: #{forward.1} parent=1 // loop_footer
      %s25 = sadd.s32 1, %s21
    $region7: #{forward.1} parent=1 // loop_footer_branch
      %20 = sbr.rel target = $region3
    $region8: #{forward.1} parent=1 // loop_exit
      _
    %1018 = vsyncpa [#allocation4], 1
    %s1019 = scalar_lea.sflag [#allocation4], 1
    %1020 = vsyncpa %s1019, 1
    %1021 = vsyncpa [#allocation6], 1

</llo_original>
